<compile_context>
chip_gen: v6e
topology: v6e:2x2x1
jax: 0.10.0
libtpu: 0.0.40
codegen_flags: <defaults>
</compile_context>

<pallas_src>
import jax
import jax.numpy as jnp
from jax.experimental import pallas as pl
from jax.experimental.pallas import tpu as pltpu


def _round_up(x, m):
    return ((x + m - 1) // m) * m


# ----------------------------- Pallas kernel ------------------------------ #
def _encoder_kernel(x_ref, w1_ref, b1_ref, w2_ref, b2_ref, o_ref):
    """Fused Linear -> Tanh -> Linear over one row tile.

    x_ref  : [tm, d_in]   (bf16 or f32 operand stream)
    w1_ref : [d_in, F]    b1_ref : [1, F]  (f32)
    w2_ref : [F, E]       b2_ref : [1, E]  (f32)
    o_ref  : [tm, E]      (f32)
    """
    # Single K = d_in matmul (lane-dense combined slab), f32 accumulation.
    acc = jnp.dot(x_ref[...], w1_ref[...], preferred_element_type=jnp.float32)
    # Bias add + tanh in f32, regardless of the operand stream dtype.
    h = jnp.tanh(acc + b1_ref[...])
    h = h.astype(w2_ref.dtype)
    o_ref[...] = (
        jnp.dot(h, w2_ref[...], preferred_element_type=jnp.float32) + b2_ref[...]
    ).astype(o_ref.dtype)


def _vmem_estimate(tm, d_in, f, e, in_bytes):
    """Rough VMEM footprint: double-buffered tiles + f32 intermediates."""
    dbl = 2
    inputs = dbl * (tm * d_in + d_in * f + f + f * e + e) * in_bytes
    output = dbl * tm * e * 4
    interm = tm * f * 4 + tm * e * 4
    return inputs + output + interm


def encoder_fused_mlp(combined, w1, b1, w2, b2, *, tm=2048, compute_dtype=jnp.bfloat16):
    """Fused Linear -> Tanh -> Linear over node-row tiles.

    combined : [N, d_in] feature slab (self feats || neighbor aggregates).
    w1 : [d_in, F]   b1 : [1, F]
    w2 : [F, E]      b2 : [1, E]
    compute_dtype : dtype of the matmul operand stream (default bf16 on all
                    generations); accumulation / bias / tanh stay in f32.
    """
    n, d_in = combined.shape
    assert w1.shape[0] == d_in
    f = w1.shape[1]
    e = w2.shape[1]

    # Operand stream cast (weights are tiny; combined is usually already cast
    # by the producer so this is a no-op there).
    if compute_dtype is not None:
        combined = combined.astype(compute_dtype)
        w1 = w1.astype(compute_dtype)
        w2 = w2.astype(compute_dtype)
    b1 = b1.astype(jnp.float32)
    b2 = b2.astype(jnp.float32)

    # Row tile: as big as possible, but capped at ceil(N/2) (rounded to 8) so
    # the grid has >= 2 steps -> both v7x TensorCores get work.
    half_rows = _round_up(max(-(-n // 2), 8), 8)
    tm_eff = max(8, min(tm, half_rows))

    # Shrink until the (double-buffered) tile set fits a conservative VMEM
    # budget that is safe under default scoped limits on v5e/v6e/v7x.
    in_bytes = jnp.dtype(combined.dtype).itemsize
    budget = 14 * 1024 * 1024
    while tm_eff > 8 and _vmem_estimate(tm_eff, d_in, f, e, in_bytes) > budget:
        tm_eff = max(8, _round_up(tm_eff // 2, 8))

    est = _vmem_estimate(tm_eff, d_in, f, e, in_bytes)
    vmem_limit = None
    if est > 12 * 1024 * 1024:
        # Raise the scoped VMEM limit only when needed; 32 MiB is safe on every
        # generation (v7x physical VMEM is 64 MiB, v5e/v6e have 128 MiB).
        vmem_limit = int(min(32 * 1024 * 1024, _round_up(2 * est, 1 << 20)))

    grid = (pl.cdiv(n, tm_eff),)  # ragged last tile handled by Pallas (masked writeback)

    out = pl.pallas_call(
        _encoder_kernel,
        out_shape=jax.ShapeDtypeStruct((n, e), jnp.float32),
        grid_spec=pl.GridSpec(
            grid=grid,
            in_specs=[
                pl.BlockSpec((tm_eff, d_in), lambda i: (i, 0)),
                pl.BlockSpec((d_in, f), lambda i: (0, 0)),
                pl.BlockSpec((1, f), lambda i: (0, 0)),
                pl.BlockSpec((f, e), lambda i: (0, 0)),
                pl.BlockSpec((1, e), lambda i: (0, 0)),
            ],
            out_specs=pl.BlockSpec((tm_eff, e), lambda i: (i, 0)),
        ),
        compiler_params=pltpu.CompilerParams(
            dimension_semantics=("parallel",),
            vmem_limit_bytes=vmem_limit,
        ),
    )(combined, w1, b1, w2, b2)

    return out


# ------------------------- plain-JAX glue (agg) ---------------------------- #
def mean_neighbor_agg(x, edge_index):
    """Stand-in aggregator: mean of source-node features per target node."""
    # TODO(synk): the original `aggs` are externally supplied attention
    # aggregators; a mean aggregator is used as a deterministic stand-in and
    # the irregular gather/scatter is left to XLA rather than a Pallas kernel.
    n = x.shape[0]
    src, dst = edge_index[0], edge_index[1]
    neigh_sum = jax.ops.segment_sum(x[src], dst, num_segments=n)
    counts = jax.ops.segment_sum(
        jnp.ones((src.shape[0],), x.dtype), dst, num_segments=n
    )
    counts = jnp.maximum(counts, 1.0)
    return neigh_sum / counts[:, None]


def init_encoder_params(key, feat_dim, embed_dim, nadjs):
    """Kaiming-normal weights (fan_in, gain=sqrt(2)), bias filled with 0.01."""
    d_in = feat_dim * (nadjs + 1)
    k1, k2 = jax.random.split(key)
    w1 = jax.random.normal(k1, (d_in, feat_dim), jnp.float32) * jnp.sqrt(2.0 / d_in)
    b1 = jnp.full((1, feat_dim), 0.01, jnp.float32)
    w2 = jax.random.normal(k2, (feat_dim, embed_dim), jnp.float32) * jnp.sqrt(
        2.0 / feat_dim
    )
    b2 = jnp.full((1, embed_dim), 0.01, jnp.float32)
    return w1, b1, w2, b2


def encoder_forward(x, edge_indices, params, *, compute_dtype=jnp.bfloat16, tm=2048):
    w1, b1, w2, b2 = params
    stream_dtype = compute_dtype if compute_dtype is not None else x.dtype
    # The aggregates must be written to HBM anyway; cast + concat builds the
    # lane-dense [N, d_in] slab in the operand-stream dtype directly.
    neigh_feats = [
        mean_neighbor_agg(x, ei).astype(stream_dtype) for ei in edge_indices
    ]
    combined = jnp.concatenate([x.astype(stream_dtype)] + neigh_feats, axis=1)
    return encoder_fused_mlp(
        combined, w1, b1, w2, b2, tm=tm, compute_dtype=compute_dtype
    )


# ---------------------------------- main ----------------------------------- #
if __name__ == "__main__":
    key = jax.random.PRNGKey(0)
    # N=100 is deliberately NOT a multiple of the row tile -> exercises the
    # ragged last tile (safe: rows independent, OOB rows never written back).
    n_nodes, feat_dim, embed_dim, nadjs, n_edges = 100, 32, 16, 2, 256

    kx, kp, *ke = jax.random.split(key, 2 + nadjs)
    x = jax.random.normal(kx, (n_nodes, feat_dim), jnp.float32)
    edge_indices = [
        jax.random.randint(ke[i], (2, n_edges), 0, n_nodes, jnp.int32)
        for i in range(nadjs)
    ]
    params = init_encoder_params(kp, feat_dim, embed_dim, nadjs)

    # Pure-JAX reference.
    w1, b1, w2, b2 = params
    neigh_ref = [mean_neighbor_agg(x, ei) for ei in edge_indices]
    combined_ref = jnp.concatenate([x] + neigh_ref, axis=1)
    ref = jnp.tanh(combined_ref @ w1 + b1) @ w2 + b2

    # f32 operand-stream path -- tight reference check.
    out_f32 = encoder_forward(x, edge_indices, params, compute_dtype=None)
    out_f32 = jax.block_until_ready(out_f32)
    assert out_f32.shape == (n_nodes, embed_dim)
    assert jnp.allclose(out_f32, ref, atol=1e-4, rtol=1e-4)

    # Default bf16 operand-stream path (all generations) -- loose check vs f32 ref.
    out_bf16 = encoder_forward(x, edge_indices, params)
    out_bf16 = jax.block_until_ready(out_bf16)
    assert out_bf16.shape == (n_nodes, embed_dim)
    assert jnp.allclose(out_bf16, ref, atol=0.15, rtol=0.15)

    print("KERNEL_OK")
</pallas_src>

<mosaic_0001>
module attributes {stable_mosaic.version = 11 : i64} {
  func.func @_encoder_kernel(%arg0: i32, %arg1: memref<56x96xf32, #tpu.memory_space<vmem>>, %arg2: memref<96x32xf32, #tpu.memory_space<vmem>>, %arg3: memref<1x32xf32, #tpu.memory_space<vmem>>, %arg4: memref<32x16xf32, #tpu.memory_space<vmem>>, %arg5: memref<1x16xf32, #tpu.memory_space<vmem>>, %arg6: memref<56x16xf32, #tpu.memory_space<vmem>>) attributes {dimension_semantics = [#tpu.dimension_semantics<parallel>], iteration_bounds = array<i64: 2>, scalar_prefetch = 0 : i64, scratch_operands = 0 : i64, tpu.core_type = #tpu.core_type<tc>, window_params = [{transform_indices = @transform_0, window_bounds = array<i64: 56, 96>}, {pipeline_mode = #tpu.pipeline_mode<synchronous>, transform_indices = @transform_1, window_bounds = array<i64: 96, 32>}, {pipeline_mode = #tpu.pipeline_mode<synchronous>, transform_indices = @transform_2, window_bounds = array<i64: 1, 32>}, {pipeline_mode = #tpu.pipeline_mode<synchronous>, transform_indices = @transform_3, window_bounds = array<i64: 32, 16>}, {pipeline_mode = #tpu.pipeline_mode<synchronous>, transform_indices = @transform_4, window_bounds = array<i64: 1, 16>}, {transform_indices = @transform_5, window_bounds = array<i64: 56, 16>}]} {
    %c0 = arith.constant 0 : index
    %c0_0 = arith.constant 0 : index
    %0 = vector.load %arg1[%c0, %c0_0] : memref<56x96xf32, #tpu.memory_space<vmem>>, vector<56x96xf32>
    %c0_1 = arith.constant 0 : index
    %c0_2 = arith.constant 0 : index
    %1 = vector.load %arg2[%c0_1, %c0_2] : memref<96x32xf32, #tpu.memory_space<vmem>>, vector<96x32xf32>
    %cst = arith.constant dense<0.000000e+00> : vector<56x32xf32>
    %2 = tpu.matmul %0, %1, %cst {dimension_numbers = #tpu.dot_dimension_numbers<[1], [0], [0], [1], [0, 0, 1, 1], [], []>} : vector<56x96xf32>, vector<96x32xf32>, vector<56x32xf32> -> vector<56x32xf32>
    %c0_3 = arith.constant 0 : index
    %c0_4 = arith.constant 0 : index
    %3 = vector.load %arg3[%c0_3, %c0_4] : memref<1x32xf32, #tpu.memory_space<vmem>>, vector<1x32xf32>
    %4 = vector.broadcast %3 : vector<1x32xf32> to vector<56x32xf32>
    %5 = arith.addf %2, %4 : vector<56x32xf32>
    %6 = math.tanh %5 : vector<56x32xf32>
    %c0_5 = arith.constant 0 : index
    %c0_6 = arith.constant 0 : index
    %7 = vector.load %arg4[%c0_5, %c0_6] : memref<32x16xf32, #tpu.memory_space<vmem>>, vector<32x16xf32>
    %cst_7 = arith.constant dense<0.000000e+00> : vector<56x16xf32>
    %8 = tpu.matmul %6, %7, %cst_7 {dimension_numbers = #tpu.dot_dimension_numbers<[1], [0], [0], [1], [0, 0, 1, 1], [], []>} : vector<56x32xf32>, vector<32x16xf32>, vector<56x16xf32> -> vector<56x16xf32>
    %c0_8 = arith.constant 0 : index
    %c0_9 = arith.constant 0 : index
    %9 = vector.load %arg5[%c0_8, %c0_9] : memref<1x16xf32, #tpu.memory_space<vmem>>, vector<1x16xf32>
    %10 = vector.broadcast %9 : vector<1x16xf32> to vector<56x16xf32>
    %11 = arith.addf %8, %10 : vector<56x16xf32>
    %c0_10 = arith.constant 0 : index
    %c0_11 = arith.constant 0 : index
    %12 = vector.load %arg6[%c0_10, %c0_11] : memref<56x16xf32, #tpu.memory_space<vmem>>, vector<56x16xf32>
    tpu.vector_store %arg6[%c0_10, %c0_11], %11 {strides = array<i32>} : memref<56x16xf32, #tpu.memory_space<vmem>>, vector<56x16xf32>,
    return
  }
  func.func @transform_0(%arg0: i32) -> (i32, i32) {
    %c0_i32 = arith.constant 0 : i32
    %c0_i32_0 = arith.constant 0 : i32
    return %arg0, %c0_i32 : i32, i32
  }
  func.func @transform_1(%arg0: i32) -> (i32, i32) {
    %c0_i32 = arith.constant 0 : i32
    %c0_i32_0 = arith.constant 0 : i32
    %c0_i32_1 = arith.constant 0 : i32
    return %c0_i32, %c0_i32_0 : i32, i32
  }
  func.func @transform_2(%arg0: i32) -> (i32, i32) {
    %c0_i32 = arith.constant 0 : i32
    %c0_i32_0 = arith.constant 0 : i32
    %c0_i32_1 = arith.constant 0 : i32
    return %c0_i32, %c0_i32_0 : i32, i32
  }
  func.func @transform_3(%arg0: i32) -> (i32, i32) {
    %c0_i32 = arith.constant 0 : i32
    %c0_i32_0 = arith.constant 0 : i32
    %c0_i32_1 = arith.constant 0 : i32
    return %c0_i32, %c0_i32_0 : i32, i32
  }
  func.func @transform_4(%arg0: i32) -> (i32, i32) {
    %c0_i32 = arith.constant 0 : i32
    %c0_i32_0 = arith.constant 0 : i32
    %c0_i32_1 = arith.constant 0 : i32
    return %c0_i32, %c0_i32_0 : i32, i32
  }
  func.func @transform_5(%arg0: i32) -> (i32, i32) {
    %c0_i32 = arith.constant 0 : i32
    %c0_i32_0 = arith.constant 0 : i32
    return %arg0, %c0_i32 : i32, i32
  }
}

</mosaic_0001>

<llo_original>
// kernel: tpu_custom_call.1
$region0: #{tpu_custom_call.1}
  #allocation0 [shape = 'u32[]', space=smem, size = 0x4, offset = 0x4, fixed_abs, tag = 'smem constant byte address 0x4 - core index']
  #allocation1 [shape = 'u32[144,128]{1,0:T(1,128)}', space=vmem, size = 0x12000, scoped, tag = 'internal scratch']
  %s0 = inlined_call_operand.vmem [shape: f32[100,96], index: 0, kind: input, shape index: {}]
  %s1 = inlined_call_operand.vmem [shape: f32[96,32], index: 1, kind: input, shape index: {}]
  %s2 = inlined_call_operand.vmem [shape: f32[1,32], index: 2, kind: input, shape index: {}]
  %s3 = inlined_call_operand.vmem [shape: f32[32,16], index: 3, kind: input, shape index: {}]
  %s4 = inlined_call_operand.vmem [shape: f32[1,16], index: 4, kind: input, shape index: {}]
  %s5 = inlined_call_operand.vmem [shape: f32[100,16], index: 5, kind: output, shape index: {}]
  %s6 = sld [smem:[#allocation0]]
  $region101: #{tpu_custom_call.1} parent=0
    _
  %s8 = ssub.s32 1, %s6
  %s9 = scalar_select 0, %s8, %s6
  $region1: #{tpu_custom_call.1} parent=0
    #allocation2 [shape = 'u8[57344]{0}', space=vmem, size = 0xe000, scoped, tag = 'output window, operand 0']
    loop: start=0, step=1, limit=4
    $region2: #{tpu_custom_call.1} parent=1 // loop_pre_header
      _
    $region3: #{tpu_custom_call.1} parent=1 // loop_header
      %s11 = sphi 0, %s15
      %p12 = scmp.ge.s32.totalorder %s11, 4
      %s21 = sphi 0, %s23
      %s24 = sphi 0, %s21
      %s25 = sphi 0, %s24
      %s41 = sphi 0, %s25
      %s45 = sphi 0, %s45
      %s47 = sphi 0, %s45
      %s48 = sphi 0, %s47
      %s62 = sphi 0, %s48
      %s66 = sphi 0, %s66
      %s68 = sphi 0, %s66
      %s69 = sphi 0, %s68
      %s83 = sphi 0, %s69
      %s87 = sphi 0, %s87
      %s89 = sphi 0, %s87
      %s90 = sphi 0, %s89
      %s104 = sphi 0, %s90
      %s108 = sphi 0, %s108
      %s110 = sphi 0, %s108
      %s111 = sphi 0, %s110
      %s125 = sphi 0, %s111
      %s131 = sphi 0, %s133
      %s134 = sphi 0, %s131
      %s135 = sphi 0, %s134
      %s151 = sphi 0, %s135
    $region4: #{tpu_custom_call.1} parent=1 // loop_header_branch
      %14 = sbr.rel (%p12) target = $region8
    $region5: #{tpu_custom_call.1} parent=1 // loop_body
      %s16 = ssub.s32 %s11, 1
      %s17 = ssub.s32 %s11, 2
      %s18 = sadd.s32 %s11, 1
      %s19 = ssub.s32 %s11, %s18
      %p20 = scmp.eq.s32.totalorder %s19, 0
      %s22 = sadd.s32 %s21, 1
      %s23 = scalar_select %p20, %s21, %s22
      %p26 = pneg %p20
      %p27 = scmp.eq.s32.totalorder %s11, 1
      %p28 = por %p26, %p27
      %p29 = scmp.ne.s32.totalorder %s21, %s24
      %p30 = scmp.eq.s32.totalorder %s11, 0
      %p31 = por %p29, %p30
      %p32 = scmp.ne.s32.totalorder %s21, %s24
      %p33 = scmp.eq.s32.totalorder %s16, 1
      %p34 = por %p32, %p33
      %p35 = scmp.ne.s32.totalorder %s24, %s25
      %p36 = scmp.eq.s32.totalorder %s16, 0
      %p37 = por %p35, %p36
      %p38 = scmp.ne.s32.totalorder %s24, %s25
      %p39 = scmp.eq.s32.totalorder %s17, 1
      %p40 = por %p38, %p39
      %p42 = scmp.ne.s32.totalorder %s25, %s41
      %p43 = scmp.eq.s32.totalorder %s17, 0
      %p44 = por %p42, %p43
      %s46 = sadd.s32 %s45, 1
      %p49 = scmp.eq.s32.totalorder %s11, 1
      %p50 = scmp.ne.s32.totalorder %s45, %s47
      %p51 = scmp.eq.s32.totalorder %s11, 0
      %p52 = por %p50, %p51
      %p53 = scmp.ne.s32.totalorder %s45, %s47
      %p54 = scmp.eq.s32.totalorder %s16, 1
      %p55 = por %p53, %p54
      %p56 = scmp.ne.s32.totalorder %s47, %s48
      %p57 = scmp.eq.s32.totalorder %s16, 0
      %p58 = por %p56, %p57
      %p59 = scmp.ne.s32.totalorder %s47, %s48
      %p60 = scmp.eq.s32.totalorder %s17, 1
      %p61 = por %p59, %p60
      %p63 = scmp.ne.s32.totalorder %s48, %s62
      %p64 = scmp.eq.s32.totalorder %s17, 0
      %p65 = por %p63, %p64
      %s67 = sadd.s32 %s66, 1
      %p70 = scmp.eq.s32.totalorder %s11, 1
      %p71 = scmp.ne.s32.totalorder %s66, %s68
      %p72 = scmp.eq.s32.totalorder %s11, 0
      %p73 = por %p71, %p72
      %p74 = scmp.ne.s32.totalorder %s66, %s68
      %p75 = scmp.eq.s32.totalorder %s16, 1
      %p76 = por %p74, %p75
      %p77 = scmp.ne.s32.totalorder %s68, %s69
      %p78 = scmp.eq.s32.totalorder %s16, 0
      %p79 = por %p77, %p78
      %p80 = scmp.ne.s32.totalorder %s68, %s69
      %p81 = scmp.eq.s32.totalorder %s17, 1
      %p82 = por %p80, %p81
      %p84 = scmp.ne.s32.totalorder %s69, %s83
      %p85 = scmp.eq.s32.totalorder %s17, 0
      %p86 = por %p84, %p85
      %s88 = sadd.s32 %s87, 1
      %p91 = scmp.eq.s32.totalorder %s11, 1
      %p92 = scmp.ne.s32.totalorder %s87, %s89
      %p93 = scmp.eq.s32.totalorder %s11, 0
      %p94 = por %p92, %p93
      %p95 = scmp.ne.s32.totalorder %s87, %s89
      %p96 = scmp.eq.s32.totalorder %s16, 1
      %p97 = por %p95, %p96
      %p98 = scmp.ne.s32.totalorder %s89, %s90
      %p99 = scmp.eq.s32.totalorder %s16, 0
      %p100 = por %p98, %p99
      %p101 = scmp.ne.s32.totalorder %s89, %s90
      %p102 = scmp.eq.s32.totalorder %s17, 1
      %p103 = por %p101, %p102
      %p105 = scmp.ne.s32.totalorder %s90, %s104
      %p106 = scmp.eq.s32.totalorder %s17, 0
      %p107 = por %p105, %p106
      %s109 = sadd.s32 %s108, 1
      %p112 = scmp.eq.s32.totalorder %s11, 1
      %p113 = scmp.ne.s32.totalorder %s108, %s110
      %p114 = scmp.eq.s32.totalorder %s11, 0
      %p115 = por %p113, %p114
      %p116 = scmp.ne.s32.totalorder %s108, %s110
      %p117 = scmp.eq.s32.totalorder %s16, 1
      %p118 = por %p116, %p117
      %p119 = scmp.ne.s32.totalorder %s110, %s111
      %p120 = scmp.eq.s32.totalorder %s16, 0
      %p121 = por %p119, %p120
      %p122 = scmp.ne.s32.totalorder %s110, %s111
      %p123 = scmp.eq.s32.totalorder %s17, 1
      %p124 = por %p122, %p123
      %p126 = scmp.ne.s32.totalorder %s111, %s125
      %p127 = scmp.eq.s32.totalorder %s17, 0
      %p128 = por %p126, %p127
      %s129 = ssub.s32 %s11, %s18
      %p130 = scmp.eq.s32.totalorder %s129, 0
      %s132 = sadd.s32 %s131, 1
      %s133 = scalar_select %p130, %s131, %s132
      %p136 = pneg %p130
      %p137 = scmp.eq.s32.totalorder %s11, 1
      %p138 = por %p136, %p137
      %p139 = scmp.ne.s32.totalorder %s131, %s134
      %p140 = scmp.eq.s32.totalorder %s11, 0
      %p141 = por %p139, %p140
      %p142 = scmp.ne.s32.totalorder %s131, %s134
      %p143 = scmp.eq.s32.totalorder %s16, 1
      %p144 = por %p142, %p143
      %p145 = scmp.ne.s32.totalorder %s134, %s135
      %p146 = scmp.eq.s32.totalorder %s16, 0
      %p147 = por %p145, %p146
      %p148 = scmp.ne.s32.totalorder %s134, %s135
      %p149 = scmp.eq.s32.totalorder %s17, 1
      %p150 = por %p148, %p149
      %p152 = scmp.ne.s32.totalorder %s135, %s151
      %p153 = scmp.eq.s32.totalorder %s17, 0
      %p154 = por %p152, %p153
      %p155 = scmp.le.s32.totalorder 1, %s11
      %p156 = scmp.lt.s32.totalorder %s11, 3
      %p157 = pnand %p155, %p156
      %p158 = pneg %p157
      // Predicated region
      $region9: #{tpu_custom_call.1} parent=5 // pred_check
        _
      $region10: #{tpu_custom_call.1} parent=5 // pred_check_branch
        %160 = sbr.rel (%p157) target = $region12
      $region11: #{tpu_custom_call.1} parent=5 // pred_region
        %s161 = ssub.s32 %s11, 1
        // Predicated region
        $region13: #{tpu_custom_call.1} parent=11 // pred_check
          %p162 = pneg %p58
        $region14: #{tpu_custom_call.1} parent=11 // pred_check_branch
          %164 = sbr.rel (%p162) target = $region16
        $region15: #{tpu_custom_call.1} parent=11 // pred_region
          _
        $region16: #{tpu_custom_call.1} parent=11 // pred_fallthru
          _
        // Predicated region
        $region17: #{tpu_custom_call.1} parent=11 // pred_check
          %p165 = pneg %p79
        $region18: #{tpu_custom_call.1} parent=11 // pred_check_branch
          %167 = sbr.rel (%p165) target = $region20
        $region19: #{tpu_custom_call.1} parent=11 // pred_region
          _
        $region20: #{tpu_custom_call.1} parent=11 // pred_fallthru
          _
        // Predicated region
        $region21: #{tpu_custom_call.1} parent=11 // pred_check
          %p168 = pneg %p100
        $region22: #{tpu_custom_call.1} parent=11 // pred_check_branch
          %170 = sbr.rel (%p168) target = $region24
        $region23: #{tpu_custom_call.1} parent=11 // pred_region
          _
        $region24: #{tpu_custom_call.1} parent=11 // pred_fallthru
          _
        // Predicated region
        $region25: #{tpu_custom_call.1} parent=11 // pred_check
          %p171 = pneg %p121
        $region26: #{tpu_custom_call.1} parent=11 // pred_check_branch
          %173 = sbr.rel (%p171) target = $region28
        $region27: #{tpu_custom_call.1} parent=11 // pred_region
          _
        $region28: #{tpu_custom_call.1} parent=11 // pred_fallthru
          _
      $region12: #{tpu_custom_call.1} parent=5 // pred_fallthru
        _
      %p174 = scmp.lt.s32.totalorder %s11, 2
      // Predicated region
      $region29: #{tpu_custom_call.1} parent=5 // pred_check
        %p175 = pneg %p174
      $region30: #{tpu_custom_call.1} parent=5 // pred_check_branch
        %177 = sbr.rel (%p175) target = $region32
      $region31: #{tpu_custom_call.1} parent=5 // pred_region
        // Predicated region
        $region33: #{tpu_custom_call.1} parent=31 // pred_check
          %p178 = pneg %p31
        $region34: #{tpu_custom_call.1} parent=31 // pred_check_branch
          %180 = sbr.rel (%p178) target = $region36
        $region35: #{tpu_custom_call.1} parent=31 // pred_region
          %s181 = smul.u32 7, %s11
          %s182 = ssub.s32 13, %s181
          %p183 = scmp.lt.s32.totalorder %s182, 7
          %s184 = scalar_select %p183, %s182, 7
          %s185 = smul.u32 128, %s184
          %p186 = scmp.lt.s32.totalorder %s181, 12
          %s187 = scalar_select %p186, %s181, 12
          %s188 = smul.addr %s187, 8
          %s189 = scalar_lea.vmem %s0, %s188
          %s190 = smul.u32 7, %s11
          %s191 = ssub.s32 13, %s190
          %p192 = scmp.lt.s32.totalorder %s191, 7
          %s193 = scalar_select %p192, %s191, 7
          %s194 = smul.u32 128, %s193
        $region36: #{tpu_custom_call.1} parent=31 // pred_fallthru
          _
      $region32: #{tpu_custom_call.1} parent=5 // pred_fallthru
        _
      %p195 = scmp.le.s32.totalorder 1, %s11
      %p196 = scmp.lt.s32.totalorder %s11, 3
      %p197 = pnand %p195, %p196
      %p198 = pneg %p197
      // Predicated region
      $region37: #{tpu_custom_call.1} parent=5 // pred_check
        _
      $region38: #{tpu_custom_call.1} parent=5 // pred_check_branch
        %200 = sbr.rel (%p197) target = $region40
      $region39: #{tpu_custom_call.1} parent=5 // pred_region
        %s201 = ssub.s32 %s11, 1
        %s202 = smul.u32 7, %s16
        %s203 = ssub.s32 13, %s202
        %p204 = scmp.lt.s32.totalorder %s203, 7
        %s205 = scalar_select %p204, %s203, 7
        %s206 = smul.u32 128, %s205
        %p207 = scmp.lt.s32.totalorder %s202, 12
        %s208 = scalar_select %p207, %s202, 12
        %s209 = smul.addr %s208, 8
        %s210 = scalar_lea.vmem %s0, %s209
        %p211 = pneg %p37
        %p212 = pneg %p34
        %p213 = pneg %p58
        %p214 = pneg %p55
        %p215 = pneg %p79
        %p216 = pneg %p76
        %p217 = pneg %p100
        %p218 = pneg %p97
        %p219 = pneg %p121
        %p220 = pneg %p118
        %p221 = pneg %p147
        %p222 = pneg %p144
        %s223 = sand.u32 %s134, 1
        %s224 = sand.u32 %s134, 1
        %s225 = smul.addr %s224, 56
        %s226 = scalar_lea.vmem [#allocation2], %s225
        %s227 = smul.u32 7, %s16
        %s228 = ssub.s32 13, %s227
        %p229 = scmp.lt.s32.totalorder %s228, 7
        %s230 = scalar_select %p229, %s228, 7
        %s231 = smul.u32 128, %s230
        %p232 = scmp.lt.s32.totalorder %s227, 12
        %s233 = scalar_select %p232, %s227, 12
        %s234 = smul.addr %s233, 8
        %s235 = scalar_lea.vmem %s0, %s234
        %s236 = smul.u32 7, %s16
        %s237 = ssub.s32 13, %s236
        %p238 = scmp.lt.s32.totalorder %s237, 7
        %s239 = scalar_select %p238, %s237, 7
        %s240 = smul.u32 128, %s239
        %s241 = smul.u32 7, %s16
        %s242 = ssub.s32 13, %s241
        %p243 = scmp.lt.s32.totalorder %s242, 7
        %s244 = scalar_select %p243, %s242, 7
        %s245 = smul.u32 128, %s244
        %v246 = vld [vmem:[%s235] sm:$0xff]
        %v247 = vld [vmem:[%s235 + $0x8] sm:$0xff]
        %v248 = vld [vmem:[%s235 + $0x10] sm:$0xff]
        %v249 = vld [vmem:[%s235 + $0x18] sm:$0xff]
        %v250 = vld [vmem:[%s235 + $0x20] sm:$0xff]
        %v251 = vld [vmem:[%s235 + $0x28] sm:$0xff]
        %v252 = vld [vmem:[%s235 + $0x30] sm:$0xff]
        %v253 = vld [vmem:[%s1] sm:$0xff]
        %v254 = vld [vmem:[%s1 + $0x8] sm:$0xff]
        %v255 = vld [vmem:[%s1 + $0x10] sm:$0xff]
        %v256 = vld [vmem:[%s1 + $0x18] sm:$0xff]
        %v257 = vld [vmem:[%s1 + $0x20] sm:$0xff]
        %v258 = vld [vmem:[%s1 + $0x28] sm:$0xff]
        %v259 = vld [vmem:[%s1 + $0x30] sm:$0xff]
        %v260 = vld [vmem:[%s1 + $0x38] sm:$0xff]
        %v261 = vld [vmem:[%s1 + $0x40] sm:$0xff]
        %v262 = vld [vmem:[%s1 + $0x48] sm:$0xff]
        %v263 = vld [vmem:[%s1 + $0x50] sm:$0xff]
        %v264 = vld [vmem:[%s1 + $0x58] sm:$0xff]
        %v265 = vld [vmem:[%s2] sm:$0x1]
        %v267 = vlaneseq
        %v268 = vshrl.u32 %v267, 7
        %v269 = vsub.s32 0, %v268
        %v270 = vrot.slane %v265, %v269
        %vm272 = vcmask 785408
        %v274 = vsel %vm272, %v246, 0
        %v277 = vsel %vm272, %v247, 0
        %v280 = vsel %vm272, %v248, 0
        %v283 = vsel %vm272, %v249, 0
        %v286 = vsel %vm272, %v250, 0
        %v289 = vsel %vm272, %v251, 0
        %v292 = vsel %vm272, %v252, 0
        %294 = vmatprep.subr.mxu0 0.0
        %295 = vmatpush1.msra.mxu0 0.0
        %296 = vmatprep.subr.mxu0 0.0
        %297 = vmatpush1.msra.mxu0 0.0
        %298 = vmatprep.subr.mxu0 0.0
        %299 = vmatpush1.msra.mxu0 0.0
        %300 = vmatprep.subr.mxu0 0.0
        %301 = vmatpush1.msra.mxu0 0.0
        %302 = vmatprep.subr.mxu0 0.0
        %303 = vmatpush1.msra.mxu0 %v264
        %304 = vmatprep.subr.mxu0 0.0
        %305 = vmatpush1.msra.mxu0 %v263
        %306 = vmatprep.subr.mxu0 0.0
        %307 = vmatpush1.msra.mxu0 %v262
        %308 = vmatprep.subr.mxu0 0.0
        %309 = vmatpush1.msra.mxu0 %v261
        %310 = vmatprep.subr.mxu0 0.0
        %311 = vmatpush1.msra.mxu0 %v260
        %312 = vmatprep.subr.mxu0 0.0
        %313 = vmatpush1.msra.mxu0 %v259
        %314 = vmatprep.subr.mxu0 0.0
        %315 = vmatpush1.msra.mxu0 %v258
        %316 = vmatprep.subr.mxu0 0.0
        %317 = vmatpush1.msra.mxu0 %v257
        %318 = vmatprep.subr.mxu0 0.0
        %319 = vmatpush1.msra.mxu0 %v256
        %320 = vmatprep.subr.mxu0 0.0
        %321 = vmatpush1.msra.mxu0 %v255
        %322 = vmatprep.subr.mxu0 0.0
        %323 = vmatpush1.msra.mxu0 %v254
        %324 = vmatprep.subr.mxu0 0.0
        %325 = vmatpush1.msra.mxu0 %v253
        %326 = vmatprep.subr.mxu0 0.0
        %327 = vmatpush2.msra.mxu0 0.0
        %328 = vmatprep.subr.mxu0 0.0
        %329 = vmatpush2.msra.mxu0 0.0
        %330 = vmatprep.subr.mxu0 0.0
        %331 = vmatpush2.msra.mxu0 0.0
        %332 = vmatprep.subr.mxu0 0.0
        %333 = vmatpush2.msra.mxu0 0.0
        %334 = vmatprep.subr.mxu0 0.0
        %335 = vmatpush2.msra.mxu0 0.0
        %336 = vmatprep.subr.mxu0 0.0
        %337 = vmatpush2.msra.mxu0 0.0
        %338 = vmatprep.subr.mxu0 0.0
        %339 = vmatpush2.msra.mxu0 0.0
        %340 = vmatprep.subr.mxu0 0.0
        %341 = vmatpush2.msra.mxu0 0.0
        %342 = vmatprep.subr.mxu0 0.0
        %343 = vmatpush2.msra.mxu0 0.0
        %344 = vmatprep.subr.mxu0 0.0
        %345 = vmatpush2.msra.mxu0 0.0
        %346 = vmatprep.subr.mxu0 0.0
        %347 = vmatpush2.msra.mxu0 0.0
        %348 = vmatprep.subr.mxu0 0.0
        %349 = vmatpush2.msra.mxu0 0.0
        %350 = vmatprep.subr.mxu0 0.0
        %351 = vmatpush2.msra.mxu0 0.0
        %352 = vmatprep.subr.mxu0 0.0
        %353 = vmatpush2.msra.mxu0 0.0
        %354 = vmatprep.subr.mxu0 0.0
        %355 = vmatpush2.msra.mxu0 0.0
        %356 = vmatprep.subr.mxu0 0.0
        %357 = vmatpush2.msra.mxu0 0.0
        %358 = vmatprep.mubr.f32.mxu0 0.0
        %359 = vmatmul.mubr.f32.gmra.mxu0 %v274
        %v360 = vpop.f32.mrf.mxu0
        %v361 = vadd.f32 %v270, %v360
        %v362 = vpop.f32.mrf.mxu0
        %363 = vmatprep.mubr.f32.mxu0 0.0
        %364 = vmatmul.mubr.f32.gmra.mxu0 %v277
        %v365 = vpop.f32.mrf.mxu0
        %v366 = vadd.f32 %v270, %v365
        %v367 = vpop.f32.mrf.mxu0
        %368 = vmatprep.mubr.f32.mxu0 0.0
        %369 = vmatmul.mubr.f32.gmra.mxu0 %v280
        %v370 = vpop.f32.mrf.mxu0
        %v371 = vadd.f32 %v270, %v370
        %v372 = vpop.f32.mrf.mxu0
        %373 = vmatprep.mubr.f32.mxu0 0.0
        %374 = vmatmul.mubr.f32.gmra.mxu0 %v283
        %v375 = vpop.f32.mrf.mxu0
        %v376 = vadd.f32 %v270, %v375
        %v377 = vpop.f32.mrf.mxu0
        %378 = vmatprep.mubr.f32.mxu0 0.0
        %379 = vmatmul.mubr.f32.gmra.mxu0 %v286
        %v380 = vpop.f32.mrf.mxu0
        %v381 = vadd.f32 %v270, %v380
        %v382 = vpop.f32.mrf.mxu0
        %383 = vmatprep.mubr.f32.mxu0 0.0
        %384 = vmatmul.mubr.f32.gmra.mxu0 %v289
        %v385 = vpop.f32.mrf.mxu0
        %v386 = vadd.f32 %v270, %v385
        %v387 = vpop.f32.mrf.mxu0
        %388 = vmatprep.mubr.f32.mxu0 0.0
        %389 = vmatmul.mubr.f32.gmra.mxu0 %v292
        %v390 = vpop.f32.mrf.mxu0
        %v391 = vadd.f32 %v270, %v390
        %v392 = vpop.f32.mrf.mxu0
        %393 = vdwg.mxu0
        %v394 = vtanh.pop %v361
        %v395 = vtanh.pop %v366
        %v396 = vtanh.pop %v371
        %v397 = vtanh.pop %v376
        %v398 = vtanh.pop %v381
        %v399 = vtanh.pop %v386
        %v400 = vtanh.pop %v391
        %v401 = vld [vmem:[%s3] sm:$0xff]
        %v402 = vld [vmem:[%s3 + $0x8] sm:$0xff]
        %v403 = vld [vmem:[%s3 + $0x10] sm:$0xff]
        %v404 = vld [vmem:[%s3 + $0x18] sm:$0xff]
        %v405 = vld [vmem:[%s4] sm:$0x1]
        %v407 = vlaneseq
        %v408 = vshrl.u32 %v407, 7
        %v409 = vsub.s32 0, %v408
        %v410 = vrot.slane %v405, %v409
        %vm412 = vcmask 261120
        %v414 = vsel %vm412, %v394, 0
        %v417 = vsel %vm412, %v395, 0
        %v420 = vsel %vm412, %v396, 0
        %v423 = vsel %vm412, %v397, 0
        %v426 = vsel %vm412, %v398, 0
        %v429 = vsel %vm412, %v399, 0
        %v432 = vsel %vm412, %v400, 0
        %434 = vmatprep.subr.mxu0 0.0
        %435 = vmatpush1.msra.mxu0 0.0
        %436 = vmatprep.subr.mxu0 0.0
        %437 = vmatpush1.msra.mxu0 0.0
        %438 = vmatprep.subr.mxu0 0.0
        %439 = vmatpush1.msra.mxu0 0.0
        %440 = vmatprep.subr.mxu0 0.0
        %441 = vmatpush1.msra.mxu0 0.0
        %442 = vmatprep.subr.mxu0 0.0
        %443 = vmatpush1.msra.mxu0 0.0
        %444 = vmatprep.subr.mxu0 0.0
        %445 = vmatpush1.msra.mxu0 0.0
        %446 = vmatprep.subr.mxu0 0.0
        %447 = vmatpush1.msra.mxu0 0.0
        %448 = vmatprep.subr.mxu0 0.0
        %449 = vmatpush1.msra.mxu0 0.0
        %450 = vmatprep.subr.mxu0 0.0
        %451 = vmatpush1.msra.mxu0 0.0
        %452 = vmatprep.subr.mxu0 0.0
        %453 = vmatpush1.msra.mxu0 0.0
        %454 = vmatprep.subr.mxu0 0.0
        %455 = vmatpush1.msra.mxu0 0.0
        %456 = vmatprep.subr.mxu0 0.0
        %457 = vmatpush1.msra.mxu0 0.0
        %458 = vmatprep.subr.mxu0 0.0
        %459 = vmatpush1.msra.mxu0 %v404
        %460 = vmatprep.subr.mxu0 0.0
        %461 = vmatpush1.msra.mxu0 %v403
        %462 = vmatprep.subr.mxu0 0.0
        %463 = vmatpush1.msra.mxu0 %v402
        %464 = vmatprep.subr.mxu0 0.0
        %465 = vmatpush1.msra.mxu0 %v401
        %466 = vmatprep.subr.mxu0 0.0
        %467 = vmatpush2.msra.mxu0 0.0
        %468 = vmatprep.subr.mxu0 0.0
        %469 = vmatpush2.msra.mxu0 0.0
        %470 = vmatprep.subr.mxu0 0.0
        %471 = vmatpush2.msra.mxu0 0.0
        %472 = vmatprep.subr.mxu0 0.0
        %473 = vmatpush2.msra.mxu0 0.0
        %474 = vmatprep.subr.mxu0 0.0
        %475 = vmatpush2.msra.mxu0 0.0
        %476 = vmatprep.subr.mxu0 0.0
        %477 = vmatpush2.msra.mxu0 0.0
        %478 = vmatprep.subr.mxu0 0.0
        %479 = vmatpush2.msra.mxu0 0.0
        %480 = vmatprep.subr.mxu0 0.0
        %481 = vmatpush2.msra.mxu0 0.0
        %482 = vmatprep.subr.mxu0 0.0
        %483 = vmatpush2.msra.mxu0 0.0
        %484 = vmatprep.subr.mxu0 0.0
        %485 = vmatpush2.msra.mxu0 0.0
        %486 = vmatprep.subr.mxu0 0.0
        %487 = vmatpush2.msra.mxu0 0.0
        %488 = vmatprep.subr.mxu0 0.0
        %489 = vmatpush2.msra.mxu0 0.0
        %490 = vmatprep.subr.mxu0 0.0
        %491 = vmatpush2.msra.mxu0 0.0
        %492 = vmatprep.subr.mxu0 0.0
        %493 = vmatpush2.msra.mxu0 0.0
        %494 = vmatprep.subr.mxu0 0.0
        %495 = vmatpush2.msra.mxu0 0.0
        %496 = vmatprep.subr.mxu0 0.0
        %497 = vmatpush2.msra.mxu0 0.0
        %498 = vmatprep.mubr.f32.mxu0 0.0
        %499 = vmatmul.mubr.f32.gmra.mxu0 %v414
        %v500 = vpop.f32.mrf.mxu0
        %v501 = vadd.f32 %v410, %v500
        %v502 = vpop.f32.mrf.mxu0
        %503 = vmatprep.mubr.f32.mxu0 0.0
        %504 = vmatmul.mubr.f32.gmra.mxu0 %v417
        %v505 = vpop.f32.mrf.mxu0
        %v506 = vadd.f32 %v410, %v505
        %v507 = vpop.f32.mrf.mxu0
        %508 = vmatprep.mubr.f32.mxu0 0.0
        %509 = vmatmul.mubr.f32.gmra.mxu0 %v420
        %v510 = vpop.f32.mrf.mxu0
        %v511 = vadd.f32 %v410, %v510
        %v512 = vpop.f32.mrf.mxu0
        %513 = vmatprep.mubr.f32.mxu0 0.0
        %514 = vmatmul.mubr.f32.gmra.mxu0 %v423
        %v515 = vpop.f32.mrf.mxu0
        %v516 = vadd.f32 %v410, %v515
        %v517 = vpop.f32.mrf.mxu0
        %518 = vmatprep.mubr.f32.mxu0 0.0
        %519 = vmatmul.mubr.f32.gmra.mxu0 %v426
        %v520 = vpop.f32.mrf.mxu0
        %v521 = vadd.f32 %v410, %v520
        %v522 = vpop.f32.mrf.mxu0
        %523 = vmatprep.mubr.f32.mxu0 0.0
        %524 = vmatmul.mubr.f32.gmra.mxu0 %v429
        %v525 = vpop.f32.mrf.mxu0
        %v526 = vadd.f32 %v410, %v525
        %v527 = vpop.f32.mrf.mxu0
        %528 = vmatprep.mubr.f32.mxu0 0.0
        %529 = vmatmul.mubr.f32.gmra.mxu0 %v432
        %v530 = vpop.f32.mrf.mxu0
        %v531 = vadd.f32 %v410, %v530
        %v532 = vpop.f32.mrf.mxu0
        %533 = vdwg.mxu0
        %vm534 = vcmask 130048
        %535 = vst.msk [vmem:[%s226] sm:$0xff] %vm534, %v501
        %536 = vst.msk [vmem:[%s226 + $0x8] sm:$0xff] %vm534, %v506
        %537 = vst.msk [vmem:[%s226 + $0x10] sm:$0xff] %vm534, %v511
        %538 = vst.msk [vmem:[%s226 + $0x18] sm:$0xff] %vm534, %v516
        %539 = vst.msk [vmem:[%s226 + $0x20] sm:$0xff] %vm534, %v521
        %540 = vst.msk [vmem:[%s226 + $0x28] sm:$0xff] %vm534, %v526
        %541 = vst.msk [vmem:[%s226 + $0x30] sm:$0xff] %vm534, %v531
        %s542 = sand.u32 %s134, 1
        %s543 = sand.u32 %s134, 1
        %s544 = smul.addr %s543, 56
        %s545 = scalar_lea.vmem [#allocation2], %s544
        // Predicated region
        $region41: #{tpu_custom_call.1} parent=39 // pred_check
          %p546 = pneg %p144
        $region42: #{tpu_custom_call.1} parent=39 // pred_check_branch
          %548 = sbr.rel (%p546) target = $region44
        $region43: #{tpu_custom_call.1} parent=39 // pred_region
          %s549 = smul.u32 7, %s16
          %s550 = ssub.s32 13, %s549
          %p551 = scmp.lt.s32.totalorder %s550, 7
          %s552 = scalar_select %p551, %s550, 7
          %s553 = smul.u32 128, %s552
          %p554 = scmp.ne.s32.totalorder 0, %s553
          %s555 = smul.addr %s549, 8
          %s556 = scalar_lea.vmem %s5, %s555
          // Predicated region
          $region45: #{tpu_custom_call.1} parent=43 // pred_check
            %p557 = pneg %p554
          $region46: #{tpu_custom_call.1} parent=43 // pred_check_branch
            %559 = sbr.rel (%p557) target = $region48
          $region47: #{tpu_custom_call.1} parent=43 // pred_region
            // Predicated region
            $region49: #{tpu_custom_call.1} parent=47 // pred_check
              _
            $region50: #{tpu_custom_call.1} parent=47 // pred_check_branch
              %561 = sbr.rel (0) target = $region52
            $region51: #{tpu_custom_call.1} parent=47 // pred_region
              // Predicated region
              $region71: #{tpu_custom_call.1} parent=51 // pred_check
                _
              $region72: #{tpu_custom_call.1} parent=51 // pred_check_branch
                %624 = sbr.rel (0) target = $region74
              $region73: #{tpu_custom_call.1} parent=51 // pred_region
                %s625 = sdiv.u32.pop %s552, 7
                %s626 = srem.u32.pop %s552, 7
                // While loop
                $region75: #{tpu_custom_call.1} parent=73 // loop_pre_header
                  _
                $region76: #{tpu_custom_call.1} parent=73 // loop_header
                  %s628 = sphi 0, %s630
                  %p629 = scmp.ge.s32.totalorder %s628, %s625
                  %s633 = sphi 0, %s652
                  %s634 = sphi %s545, %s655
                  %s635 = sphi %s556, %s656
                $region77: #{tpu_custom_call.1} parent=73 // loop_header_branch
                  %632 = sbr.rel (%p629) target = $region81
                $region78: #{tpu_custom_call.1} parent=73 // loop_body
                  %v636 = vld [vmem:[%s634] sm:$0xff]
                  %637 = vst [vmem:[%s635] sm:$0xff] %v636
                  %v638 = vld [vmem:[%s634 + $0x8] sm:$0xff]
                  %639 = vst [vmem:[%s635 + $0x8] sm:$0xff] %v638
                  %v640 = vld [vmem:[%s634 + $0x10] sm:$0xff]
                  %641 = vst [vmem:[%s635 + $0x10] sm:$0xff] %v640
                  %v642 = vld [vmem:[%s634 + $0x18] sm:$0xff]
                  %643 = vst [vmem:[%s635 + $0x18] sm:$0xff] %v642
                  %v644 = vld [vmem:[%s634 + $0x20] sm:$0xff]
                  %645 = vst [vmem:[%s635 + $0x20] sm:$0xff] %v644
                  %v646 = vld [vmem:[%s634 + $0x28] sm:$0xff]
                  %647 = vst [vmem:[%s635 + $0x28] sm:$0xff] %v646
                  %v648 = vld [vmem:[%s634 + $0x30] sm:$0xff]
                  %649 = vst [vmem:[%s635 + $0x30] sm:$0xff] %v648
                  %s650 = sadd.s32 1, %s633
                  %p651 = scmp.ge.s32.totalorder %s650, %s625
                  %s652 = scalar_select %p651, 0, %s650
                  %s653 = smul.u32 %s652, 56
                  %s654 = smul.u32 %s652, 56
                  %s655 = scalar_lea.vmem %s545, %s653 [#allocation2]
                  %s656 = scalar_lea.vmem %s556, %s654
                $region79: #{tpu_custom_call.1} parent=73 // loop_footer
                  %s630 = sadd.s32 %s628, 1
                $region80: #{tpu_custom_call.1} parent=73 // loop_footer_branch
                  %627 = sbr.rel target = $region76
                $region81: #{tpu_custom_call.1} parent=73 // loop_exit
                  _
                %s657 = sdiv.u32.pop %s552, 7
                %s658 = srem.u32.pop %s552, 7
                %s659 = smul.u32 %s657, 7
                %s660 = smul.u32 8, %s659
                %s661 = scalar_lea.vmem %s545, %s660 [#allocation2]
                %s662 = smul.u32 8, %s659
                %s663 = scalar_lea.vmem %s556, %s662
                // While loop
                $region82: #{tpu_custom_call.1} parent=73 // loop_pre_header
                  _
                $region83: #{tpu_custom_call.1} parent=73 // loop_header
                  %s665 = sphi 0, %s667
                  %p666 = scmp.ge.s32.totalorder %s665, %s658
                  %s670 = sphi 0, %s677
                  %s671 = sphi %s661, %s680
                  %s672 = sphi %s663, %s681
                $region84: #{tpu_custom_call.1} parent=73 // loop_header_branch
                  %669 = sbr.rel (%p666) target = $region88
                $region85: #{tpu_custom_call.1} parent=73 // loop_body
                  %v673 = vld [vmem:[%s671] sm:$0xff]
                  %674 = vst [vmem:[%s672] sm:$0xff] %v673
                  %s675 = sadd.s32 1, %s670
                  %p676 = scmp.ge.s32.totalorder %s675, %s658
                  %s677 = scalar_select %p676, 0, %s675
                  %s678 = smul.u32 %s677, 8
                  %s679 = smul.u32 %s677, 8
                  %s680 = scalar_lea.vmem %s661, %s678 [#allocation2]
                  %s681 = scalar_lea.vmem %s663, %s679
                $region86: #{tpu_custom_call.1} parent=73 // loop_footer
                  %s667 = sadd.s32 %s665, 1
                $region87: #{tpu_custom_call.1} parent=73 // loop_footer_branch
                  %664 = sbr.rel target = $region83
                $region88: #{tpu_custom_call.1} parent=73 // loop_exit
                  _
              $region74: #{tpu_custom_call.1} parent=51 // pred_fallthru
                _
              // Predicated region
              $region89: #{tpu_custom_call.1} parent=51 // pred_check
                _
              $region90: #{tpu_custom_call.1} parent=51 // pred_check_branch
                %683 = sbr.rel target = $region92
              $region91: #{tpu_custom_call.1} parent=51 // pred_region
                _
              $region92: #{tpu_custom_call.1} parent=51 // pred_fallthru
                _
            $region52: #{tpu_custom_call.1} parent=47 // pred_fallthru
              _
            // Predicated region
            $region53: #{tpu_custom_call.1} parent=47 // pred_check
              _
            $region54: #{tpu_custom_call.1} parent=47 // pred_check_branch
              %563 = sbr.rel target = $region56
            $region55: #{tpu_custom_call.1} parent=47 // pred_region
              %s565 = ssub.s32 256, 1
              %s566 = sdiv.u32.pop %s552, 7
              %s567 = srem.u32.pop %s552, 7
              // While loop
              $region57: #{tpu_custom_call.1} parent=55 // loop_pre_header
                _
              $region58: #{tpu_custom_call.1} parent=55 // loop_header
                %s569 = sphi 0, %s571
                %p570 = scmp.ge.s32.totalorder %s569, %s566
                %s574 = sphi 0, %s593
                %s575 = sphi %s545, %s596
                %s576 = sphi %s556, %s597
              $region59: #{tpu_custom_call.1} parent=55 // loop_header_branch
                %573 = sbr.rel (%p570) target = $region63
              $region60: #{tpu_custom_call.1} parent=55 // loop_body
                %v577 = vld [vmem:[%s575] sm:%s565]
                %578 = vst [vmem:[%s576] sm:%s565] %v577
                %v579 = vld [vmem:[%s575 + $0x8] sm:%s565]
                %580 = vst [vmem:[%s576 + $0x8] sm:%s565] %v579
                %v581 = vld [vmem:[%s575 + $0x10] sm:%s565]
                %582 = vst [vmem:[%s576 + $0x10] sm:%s565] %v581
                %v583 = vld [vmem:[%s575 + $0x18] sm:%s565]
                %584 = vst [vmem:[%s576 + $0x18] sm:%s565] %v583
                %v585 = vld [vmem:[%s575 + $0x20] sm:%s565]
                %586 = vst [vmem:[%s576 + $0x20] sm:%s565] %v585
                %v587 = vld [vmem:[%s575 + $0x28] sm:%s565]
                %588 = vst [vmem:[%s576 + $0x28] sm:%s565] %v587
                %v589 = vld [vmem:[%s575 + $0x30] sm:%s565]
                %590 = vst [vmem:[%s576 + $0x30] sm:%s565] %v589
                %s591 = sadd.s32 1, %s574
                %p592 = scmp.ge.s32.totalorder %s591, %s566
                %s593 = scalar_select %p592, 0, %s591
                %s594 = smul.u32 %s593, 56
                %s595 = smul.u32 %s593, 56
                %s596 = scalar_lea.vmem %s545, %s594 [#allocation2]
                %s597 = scalar_lea.vmem %s556, %s595
              $region61: #{tpu_custom_call.1} parent=55 // loop_footer
                %s571 = sadd.s32 %s569, 1
              $region62: #{tpu_custom_call.1} parent=55 // loop_footer_branch
                %568 = sbr.rel target = $region58
              $region63: #{tpu_custom_call.1} parent=55 // loop_exit
                _
              %s598 = sdiv.u32.pop %s552, 7
              %s599 = srem.u32.pop %s552, 7
              %s600 = smul.u32 %s598, 7
              %s601 = smul.u32 8, %s600
              %s602 = scalar_lea.vmem %s545, %s601 [#allocation2]
              %s603 = smul.u32 8, %s600
              %s604 = scalar_lea.vmem %s556, %s603
              // While loop
              $region64: #{tpu_custom_call.1} parent=55 // loop_pre_header
                _
              $region65: #{tpu_custom_call.1} parent=55 // loop_header
                %s606 = sphi 0, %s608
                %p607 = scmp.ge.s32.totalorder %s606, %s599
                %s611 = sphi 0, %s618
                %s612 = sphi %s602, %s621
                %s613 = sphi %s604, %s622
              $region66: #{tpu_custom_call.1} parent=55 // loop_header_branch
                %610 = sbr.rel (%p607) target = $region70
              $region67: #{tpu_custom_call.1} parent=55 // loop_body
                %v614 = vld [vmem:[%s612] sm:%s565]
                %615 = vst [vmem:[%s613] sm:%s565] %v614
                %s616 = sadd.s32 1, %s611
                %p617 = scmp.ge.s32.totalorder %s616, %s599
                %s618 = scalar_select %p617, 0, %s616
                %s619 = smul.u32 %s618, 8
                %s620 = smul.u32 %s618, 8
                %s621 = scalar_lea.vmem %s602, %s619 [#allocation2]
                %s622 = scalar_lea.vmem %s604, %s620
              $region68: #{tpu_custom_call.1} parent=55 // loop_footer
                %s608 = sadd.s32 %s606, 1
              $region69: #{tpu_custom_call.1} parent=55 // loop_footer_branch
                %605 = sbr.rel target = $region65
              $region70: #{tpu_custom_call.1} parent=55 // loop_exit
                _
            $region56: #{tpu_custom_call.1} parent=47 // pred_fallthru
              _
          $region48: #{tpu_custom_call.1} parent=43 // pred_fallthru
            _
          %684 = vnop
        $region44: #{tpu_custom_call.1} parent=39 // pred_fallthru
          _
      $region40: #{tpu_custom_call.1} parent=5 // pred_fallthru
        _
      %p685 = scmp.le.s32.totalorder 2, %s11
      // Predicated region
      $region93: #{tpu_custom_call.1} parent=5 // pred_check
        %p686 = pneg %p685
      $region94: #{tpu_custom_call.1} parent=5 // pred_check_branch
        %688 = sbr.rel (%p686) target = $region96
      $region95: #{tpu_custom_call.1} parent=5 // pred_region
        %s689 = ssub.s32 %s11, 2
        // Predicated region
        $region97: #{tpu_custom_call.1} parent=95 // pred_check
          %p690 = pneg %p150
        $region98: #{tpu_custom_call.1} parent=95 // pred_check_branch
          %692 = sbr.rel (%p690) target = $region100
        $region99: #{tpu_custom_call.1} parent=95 // pred_region
          %s693 = sand.u32 %s135, 1
          %s694 = sand.u32 %s135, 1
          %s695 = smul.addr %s694, 56
          %s696 = scalar_lea.vmem [#allocation2], %s695
        $region100: #{tpu_custom_call.1} parent=95 // pred_fallthru
          _
      $region96: #{tpu_custom_call.1} parent=5 // pred_fallthru
        _
    $region6: #{tpu_custom_call.1} parent=1 // loop_footer
      %s15 = sadd.s32 1, %s11
    $region7: #{tpu_custom_call.1} parent=1 // loop_footer_branch
      %10 = sbr.rel target = $region3
    $region8: #{tpu_custom_call.1} parent=1 // loop_exit
      _

</llo_original>
